<compile_context>
chip_gen: v7x
topology: tpu7x:2x2x1
jax: 0.10.0
libtpu: 0.0.40
codegen_flags: <defaults>
</compile_context>

<pallas_src>
import jax
import jax.numpy as jnp
from jax.experimental import pallas as pl
from jax.experimental.pallas import tpu as pltpu


def _round_up(x, m):
    return ((x + m - 1) // m) * m


def _pick_hw_tile(hw, batch_tile, num_channels, itemsize,
                  target=4096, vmem_budget=20 * 1024 * 1024):
    """Largest multiple of 128 <= target that divides round_up(hw, 128) and
    keeps the pipelined pixel footprint (2x double-buffered pixel block +
    full-width f32 accumulator) within `vmem_budget`."""
    hwp = _round_up(hw, 128)
    per_col = batch_tile * num_channels * (2 * itemsize + 4)
    max_cols = max(128, (vmem_budget // per_col) // 128 * 128)
    t = min(target, hwp, max_cols)
    t = max(128, (t // 128) * 128)
    while hwp % t != 0:
        t -= 128
    return t


def _make_kernel(hw_true, batch_tile, num_channels, d_pad, num_classes):
    inv_hw = 1.0 / float(hw_true)

    def kernel(x_ref, w_ref, b_ref, y_ref, pw_ref,
               emb_ref, logits_ref, loss_ref, acc_ref):
        hw_step = pl.program_id(1)

        @pl.when(hw_step == 0)
        def _first():
            # First spatial chunk initialises the accumulator directly
            # (no separate zero-init store pass).
            acc_ref[...] = x_ref[...].astype(jnp.float32)

        @pl.when(hw_step != 0)
        def _accumulate():
            # Bulk of the GAP: pure element-wise (VPU) f32 accumulation.
            acc_ref[...] += x_ref[...].astype(jnp.float32)

        @pl.when(hw_step == pl.num_programs(1) - 1)
        def _finalize():
            hw_tile = acc_ref.shape[-1]
            # Single cross-lane reduce, once per batch tile.
            acc3 = acc_ref[...].reshape(batch_tile, num_channels, hw_tile)
            feat = jnp.sum(acc3, axis=-1) * inv_hw               # (Bt, C)

            # Fused projection + classification head: one MXU pass.
            fused = jnp.dot(feat, w_ref[...],
                            preferred_element_type=jnp.float32) + b_ref[...]
            emb = fused[:, :d_pad]                               # (Bt, Dp)
            logits = fused[:, d_pad:]                            # (Bt, Kp)
            emb_ref[...] = emb
            logits_ref[...] = logits

            # pos-weighted BCE-with-logits, single softplus per element:
            #   pw*y*sp(-x) + (1-y)*sp(x) = sp(x)*(pw*y + 1 - y) - pw*y*x
            y = y_ref[...]
            pw = pw_ref[...]
            sp = jnp.maximum(logits, 0.0) + jnp.log1p(jnp.exp(-jnp.abs(logits)))
            wy = pw * y
            per_elem = sp * (wy + 1.0 - y) - wy * logits
            lane = jax.lax.broadcasted_iota(jnp.int32, per_elem.shape, 1)
            mask = (lane < num_classes).astype(jnp.float32)
            part = jnp.sum(per_elem * mask)                      # scalar partial
            loss_ref[...] = part * jnp.ones(loss_ref.shape, jnp.float32)

    return kernel


def image_supervise_loss_weighted(pixel_values, labels,
                                  w_proj, b_proj, w_cls, b_cls, pos_weight,
                                  *, batch_tile=None, hw_tile=None):
    """Forward pass of ImageSuperviseLoss_weighted (mode='multilabel')."""
    B, C, H, W = pixel_values.shape
    D = w_proj.shape[1]
    K = w_cls.shape[1]
    HW = H * W
    f32 = jnp.float32

    # ---- tiling choices -----------------------------------------------------
    if batch_tile is None:
        if B > 8 and B % 8 == 0:
            # >=2 batch tiles (each a multiple of 8) so the "parallel" grid
            # axis can be sharded across v7x's two TensorCores.
            batch_tile = max(8, (B // 2) // 8 * 8)
            while B % batch_tile != 0:
                batch_tile -= 8
        else:
            batch_tile = B
    assert B % batch_tile == 0, "batch_tile must divide B"
    assert batch_tile == B or batch_tile % 8 == 0, \
        "batch_tile must equal B or be a multiple of 8"

    itemsize = pixel_values.dtype.itemsize
    if hw_tile is None:
        hw_tile = _pick_hw_tile(HW, batch_tile, C, itemsize)
    assert hw_tile % 128 == 0 or hw_tile == HW, "hw_tile must be lane aligned"

    HWp = _round_up(HW, hw_tile)          # spatial zero-pad (contributes 0 to GAP)
    nhw = HWp // hw_tile
    nb = B // batch_tile

    Dp = _round_up(D, 128)
    Kp = _round_up(K, 128)

    # ---- operand prep -------------------------------------------------------
    # Channel-folded pixel layout (dense sublanes), native dtype, zero-padded HW.
    x = pixel_values.reshape(B * C, HW)
    if HWp > HW:
        x = jnp.pad(x, ((0, 0), (0, HWp - HW)))

    # Fused projection + head:  logits = feat @ (Wp@Wc) + (bp@Wc + bc)
    wp32 = w_proj.astype(f32)
    wc32 = w_cls.astype(f32)
    bp32 = b_proj.astype(f32)
    bc32 = b_cls.astype(f32)
    w_emb = jnp.pad(wp32, ((0, 0), (0, Dp - D)))
    w_log = jnp.pad(wp32 @ wc32, ((0, 0), (0, Kp - K)))
    w_fused = jnp.concatenate([w_emb, w_log], axis=1)            # (C, Dp+Kp)
    b_emb = jnp.pad(bp32.reshape(1, D), ((0, 0), (0, Dp - D)))
    b_log = jnp.pad((bp32 @ wc32 + bc32).reshape(1, K), ((0, 0), (0, Kp - K)))
    b_fused = jnp.concatenate([b_emb, b_log], axis=1)            # (1, Dp+Kp)

    y = jnp.pad(labels.astype(f32), ((0, 0), (0, Kp - K)))
    pw = jnp.pad(pos_weight.astype(f32).reshape(1, K), ((0, 0), (0, Kp - K)))

    kernel = _make_kernel(HW, batch_tile, C, Dp, K)

    emb, logits, loss_part = pl.pallas_call(
        kernel,
        grid_spec=pltpu.PrefetchScalarGridSpec(
            num_scalar_prefetch=0,
            grid=(nb, nhw),
            in_specs=[
                # pixels: channel-folded, tiled over batch (parallel) and
                # spatial (innermost reduction)
                pl.BlockSpec((batch_tile * C, hw_tile), lambda b, k: (b, k)),
                # fused weights / bias / pos_weight: constant -> VMEM resident
                pl.BlockSpec((C, Dp + Kp), lambda b, k: (0, 0)),
                pl.BlockSpec((1, Dp + Kp), lambda b, k: (0, 0)),
                # labels: per batch tile
                pl.BlockSpec((batch_tile, Kp), lambda b, k: (b, 0)),
                pl.BlockSpec((1, Kp), lambda b, k: (0, 0)),
            ],
            out_specs=(
                pl.BlockSpec((batch_tile, Dp), lambda b, k: (b, 0)),
                pl.BlockSpec((batch_tile, Kp), lambda b, k: (b, 0)),
                pl.BlockSpec((1, 1, 128), lambda b, k: (b, 0, 0)),
            ),
            scratch_shapes=[pltpu.VMEM((batch_tile * C, hw_tile), f32)],
        ),
        out_shape=(
            jax.ShapeDtypeStruct((B, Dp), f32),
            jax.ShapeDtypeStruct((B, Kp), f32),
            jax.ShapeDtypeStruct((nb, 1, 128), f32),
        ),
        compiler_params=pltpu.CompilerParams(
            dimension_semantics=("parallel", "arbitrary"),
            vmem_limit_bytes=32 * 1024 * 1024),
    )(x, w_fused, b_fused, y, pw)

    # Combine per-batch-tile partial sums -> mean over the real B*K elements.
    loss = jnp.sum(loss_part[:, 0, 0]) / float(B * K)

    return {
        "embedding": emb[:, :D],
        "logits": logits[:, :K],
        "loss_value": loss,
    }


if __name__ == "__main__":
    B, C, H, W = 2, 4, 16, 16     # pixel_values NCHW
    D = 32                        # embedding dim
    K = 14                        # num classes (multilabel)

    key = jax.random.PRNGKey(0)
    k_px, k_lbl, k_wp, k_bp, k_wc, k_bc = jax.random.split(key, 6)

    pixel_values = jax.random.normal(k_px, (B, C, H, W), dtype=jnp.float32)
    labels = (jax.random.uniform(k_lbl, (B, K)) > 0.5).astype(jnp.float32)

    # deterministic synthetic parameters (shapes implied by the module)
    w_proj = 0.1 * jax.random.normal(k_wp, (C, D), dtype=jnp.float32)
    b_proj = 0.01 * jax.random.normal(k_bp, (D,), dtype=jnp.float32)
    w_cls = 0.1 * jax.random.normal(k_wc, (D, K), dtype=jnp.float32)
    b_cls = 0.01 * jax.random.normal(k_bc, (K,), dtype=jnp.float32)
    pos_weight = jnp.full((K,), 2.0, dtype=jnp.float32)   # BCE pos_weight

    # hw_tile=128 exercises the multi-step spatial reduction (H*W=256 -> 2 steps)
    outputs = image_supervise_loss_weighted(
        pixel_values, labels, w_proj, b_proj, w_cls, b_cls, pos_weight,
        hw_tile=128)
    jax.block_until_ready(outputs["loss_value"])

    # quick sanity check against a pure-JAX reference
    feat_ref = jnp.mean(pixel_values, axis=(2, 3))
    emb_ref = feat_ref @ w_proj + b_proj
    logits_ref = emb_ref @ w_cls + b_cls
    sp = lambda z: jnp.maximum(z, 0.0) + jnp.log1p(jnp.exp(-jnp.abs(z)))
    loss_ref = jnp.mean(pos_weight[None, :] * labels * sp(-logits_ref)
                        + (1.0 - labels) * sp(logits_ref))
    assert jnp.allclose(outputs["embedding"], emb_ref, atol=1e-5)
    assert jnp.allclose(outputs["logits"], logits_ref, atol=1e-5)
    assert jnp.allclose(outputs["loss_value"], loss_ref, atol=1e-5)

    print("KERNEL_OK")
</pallas_src>

<mosaic_0001>
module attributes {stable_mosaic.version = 11 : i64} {
  func.func @kernel(%arg0: i32, %arg1: i32, %arg2: memref<8x128xf32, #tpu.memory_space<vmem>>, %arg3: memref<4x256xf32, #tpu.memory_space<vmem>>, %arg4: memref<1x256xf32, #tpu.memory_space<vmem>>, %arg5: memref<2x128xf32, #tpu.memory_space<vmem>>, %arg6: memref<1x128xf32, #tpu.memory_space<vmem>>, %arg7: memref<2x128xf32, #tpu.memory_space<vmem>>, %arg8: memref<2x128xf32, #tpu.memory_space<vmem>>, %arg9: memref<1x1x128xf32, #tpu.memory_space<vmem>>, %arg10: memref<8x128xf32, #tpu.memory_space<vmem>>) attributes {dimension_semantics = [#tpu.dimension_semantics<parallel>, #tpu.dimension_semantics<arbitrary>], iteration_bounds = array<i64: 1, 2>, scalar_prefetch = 0 : i64, scratch_operands = 1 : i64, tpu.core_type = #tpu.core_type<tc>, window_params = [{transform_indices = @transform_0, window_bounds = array<i64: 8, 128>}, {pipeline_mode = #tpu.pipeline_mode<synchronous>, transform_indices = @transform_1, window_bounds = array<i64: 4, 256>}, {pipeline_mode = #tpu.pipeline_mode<synchronous>, transform_indices = @transform_2, window_bounds = array<i64: 1, 256>}, {transform_indices = @transform_3, window_bounds = array<i64: 2, 128>}, {pipeline_mode = #tpu.pipeline_mode<synchronous>, transform_indices = @transform_4, window_bounds = array<i64: 1, 128>}, {transform_indices = @transform_5, window_bounds = array<i64: 2, 128>}, {transform_indices = @transform_6, window_bounds = array<i64: 2, 128>}, {transform_indices = @transform_7, window_bounds = array<i64: 1, 1, 128>}]} {
    %c0_i32 = arith.constant 0 : i32
    %0 = arith.cmpi eq, %arg1, %c0_i32 : i32
    %1 = arith.extui %0 : i1 to i32
    %c0_i32_0 = arith.constant 0 : i32
    %2 = arith.cmpi ne, %1, %c0_i32_0 : i32
    scf.if %2 {
      %c0 = arith.constant 0 : index
      %c0_4 = arith.constant 0 : index
      %9 = vector.load %arg2[%c0, %c0_4] : memref<8x128xf32, #tpu.memory_space<vmem>>, vector<8x128xf32>
      %c0_5 = arith.constant 0 : index
      %c0_6 = arith.constant 0 : index
      %10 = vector.load %arg10[%c0_5, %c0_6] : memref<8x128xf32, #tpu.memory_space<vmem>>, vector<8x128xf32>
      tpu.vector_store %arg10[%c0_5, %c0_6], %9 {strides = array<i32>} : memref<8x128xf32, #tpu.memory_space<vmem>>, vector<8x128xf32>,
    } else {
    }
    %c0_i32_1 = arith.constant 0 : i32
    %3 = arith.cmpi ne, %arg1, %c0_i32_1 : i32
    %4 = arith.extui %3 : i1 to i32
    %c0_i32_2 = arith.constant 0 : i32
    %5 = arith.cmpi ne, %4, %c0_i32_2 : i32
    scf.if %5 {
      %c0 = arith.constant 0 : index
      %c0_4 = arith.constant 0 : index
      %9 = vector.load %arg10[%c0, %c0_4] : memref<8x128xf32, #tpu.memory_space<vmem>>, vector<8x128xf32>
      %c0_5 = arith.constant 0 : index
      %c0_6 = arith.constant 0 : index
      %10 = vector.load %arg2[%c0_5, %c0_6] : memref<8x128xf32, #tpu.memory_space<vmem>>, vector<8x128xf32>
      %11 = arith.addf %9, %10 : vector<8x128xf32>
      %c0_7 = arith.constant 0 : index
      %c0_8 = arith.constant 0 : index
      %12 = vector.load %arg10[%c0_7, %c0_8] : memref<8x128xf32, #tpu.memory_space<vmem>>, vector<8x128xf32>
      tpu.vector_store %arg10[%c0_7, %c0_8], %11 {strides = array<i32>} : memref<8x128xf32, #tpu.memory_space<vmem>>, vector<8x128xf32>,
    } else {
    }
    %c1_i32 = arith.constant 1 : i32
    %6 = arith.cmpi eq, %arg1, %c1_i32 : i32
    %7 = arith.extui %6 : i1 to i32
    %c0_i32_3 = arith.constant 0 : i32
    %8 = arith.cmpi ne, %7, %c0_i32_3 : i32
    scf.if %8 {
      %c0 = arith.constant 0 : index
      %c0_4 = arith.constant 0 : index
      %9 = vector.load %arg10[%c0, %c0_4] : memref<8x128xf32, #tpu.memory_space<vmem>>, vector<8x128xf32>
      %10 = vector.shape_cast %9 : vector<8x128xf32> to vector<2x4x128xf32>
      %cst = arith.constant dense<0.000000e+00> : vector<2x4xf32>
      %11 = vector.multi_reduction <add>, %10, %cst [2] : vector<2x4x128xf32> to vector<2x4xf32>
      %cst_5 = arith.constant 3.906250e-03 : f32
      %12 = vector.broadcast %cst_5 : f32 to vector<2x4xf32>
      %13 = arith.mulf %11, %12 : vector<2x4xf32>
      %c0_6 = arith.constant 0 : index
      %c0_7 = arith.constant 0 : index
      %14 = vector.load %arg3[%c0_6, %c0_7] : memref<4x256xf32, #tpu.memory_space<vmem>>, vector<4x256xf32>
      %cst_8 = arith.constant dense<0.000000e+00> : vector<2x256xf32>
      %15 = tpu.matmul %13, %14, %cst_8 {dimension_numbers = #tpu.dot_dimension_numbers<[1], [0], [0], [1], [0, 0, 1, 1], [], []>} : vector<2x4xf32>, vector<4x256xf32>, vector<2x256xf32> -> vector<2x256xf32>
      %c0_9 = arith.constant 0 : index
      %c0_10 = arith.constant 0 : index
      %16 = vector.load %arg4[%c0_9, %c0_10] : memref<1x256xf32, #tpu.memory_space<vmem>>, vector<1x256xf32>
      %17 = vector.broadcast %16 : vector<1x256xf32> to vector<2x256xf32>
      %18 = arith.addf %15, %17 : vector<2x256xf32>
      %19 = vector.extract_strided_slice %18 {offsets = [0, 0], sizes = [2, 128], strides = [1, 1]} : vector<2x256xf32> to vector<2x128xf32>
      %20 = vector.extract_strided_slice %18 {offsets = [0, 128], sizes = [2, 128], strides = [1, 1]} : vector<2x256xf32> to vector<2x128xf32>
      %c0_11 = arith.constant 0 : index
      %c0_12 = arith.constant 0 : index
      %21 = vector.load %arg7[%c0_11, %c0_12] : memref<2x128xf32, #tpu.memory_space<vmem>>, vector<2x128xf32>
      tpu.vector_store %arg7[%c0_11, %c0_12], %19 {strides = array<i32>} : memref<2x128xf32, #tpu.memory_space<vmem>>, vector<2x128xf32>,
      %c0_13 = arith.constant 0 : index
      %c0_14 = arith.constant 0 : index
      %22 = vector.load %arg8[%c0_13, %c0_14] : memref<2x128xf32, #tpu.memory_space<vmem>>, vector<2x128xf32>
      tpu.vector_store %arg8[%c0_13, %c0_14], %20 {strides = array<i32>} : memref<2x128xf32, #tpu.memory_space<vmem>>, vector<2x128xf32>,
      %c0_15 = arith.constant 0 : index
      %c0_16 = arith.constant 0 : index
      %23 = vector.load %arg5[%c0_15, %c0_16] : memref<2x128xf32, #tpu.memory_space<vmem>>, vector<2x128xf32>
      %c0_17 = arith.constant 0 : index
      %c0_18 = arith.constant 0 : index
      %24 = vector.load %arg6[%c0_17, %c0_18] : memref<1x128xf32, #tpu.memory_space<vmem>>, vector<1x128xf32>
      %cst_19 = arith.constant 0.000000e+00 : f32
      %25 = vector.broadcast %cst_19 : f32 to vector<2x128xf32>
      %26 = arith.maximumf %20, %25 : vector<2x128xf32>
      %27 = math.absf %20 : vector<2x128xf32>
      %cst_20 = arith.constant 0.000000e+00 : f32
      %28 = vector.broadcast %cst_20 : f32 to vector<2x128xf32>
      %29 = arith.subf %28, %27 : vector<2x128xf32>
      %30 = math.exp %29 : vector<2x128xf32>
      %31 = math.log1p %30 : vector<2x128xf32>
      %32 = arith.addf %26, %31 : vector<2x128xf32>
      %33 = vector.broadcast %24 : vector<1x128xf32> to vector<2x128xf32>
      %34 = arith.mulf %33, %23 : vector<2x128xf32>
      %cst_21 = arith.constant 1.000000e+00 : f32
      %35 = vector.broadcast %cst_21 : f32 to vector<2x128xf32>
      %36 = arith.addf %34, %35 : vector<2x128xf32>
      %37 = arith.subf %36, %23 : vector<2x128xf32>
      %38 = arith.mulf %32, %37 : vector<2x128xf32>
      %39 = arith.mulf %34, %20 : vector<2x128xf32>
      %40 = arith.subf %38, %39 : vector<2x128xf32>
      %41 = tpu.iota {dimensions = array<i32: 1>} : vector<2x128xi32>
      %c14_i32 = arith.constant 14 : i32
      %42 = vector.broadcast %c14_i32 : i32 to vector<2x128xi32>
      %43 = arith.cmpi slt, %41, %42 : vector<2x128xi32>
      %44 = arith.extui %43 : vector<2x128xi1> to vector<2x128xi32>
      %45 = arith.sitofp %44 : vector<2x128xi32> to vector<2x128xf32>
      %46 = arith.mulf %40, %45 : vector<2x128xf32>
      %47 = vector.shape_cast %46 : vector<2x128xf32> to vector<1x2x128xf32>
      %cst_22 = arith.constant dense<0.000000e+00> : vector<1xf32>
      %48 = vector.multi_reduction <add>, %47, %cst_22 [1, 2] : vector<1x2x128xf32> to vector<1xf32>
      %49 = vector.shape_cast %48 : vector<1xf32> to vector<1x1x1xf32>
      %50 = vector.extract %49[0, 0, 0] : f32 from vector<1x1x1xf32>
      %cst_23 = arith.constant 1.000000e+00 : f32
      %51 = vector.broadcast %cst_23 : f32 to vector<1x1x128xf32>
      %52 = vector.broadcast %50 : f32 to vector<1x1x128xf32>
      %53 = arith.mulf %52, %51 : vector<1x1x128xf32>
      %c0_24 = arith.constant 0 : index
      %c0_25 = arith.constant 0 : index
      %c0_26 = arith.constant 0 : index
      %54 = vector.load %arg9[%c0_24, %c0_25, %c0_26] : memref<1x1x128xf32, #tpu.memory_space<vmem>>, vector<1x1x128xf32>
      tpu.vector_store %arg9[%c0_24, %c0_25, %c0_26], %53 {strides = array<i32>} : memref<1x1x128xf32, #tpu.memory_space<vmem>>, vector<1x1x128xf32>,
    } else {
    }
    return
  }
  func.func @transform_0(%arg0: i32, %arg1: i32) -> (i32, i32) {
    %c0_i32 = arith.constant 0 : i32
    return %arg0, %arg1 : i32, i32
  }
  func.func @transform_1(%arg0: i32, %arg1: i32) -> (i32, i32) {
    %c0_i32 = arith.constant 0 : i32
    %c0_i32_0 = arith.constant 0 : i32
    %c0_i32_1 = arith.constant 0 : i32
    return %c0_i32, %c0_i32_0 : i32, i32
  }
  func.func @transform_2(%arg0: i32, %arg1: i32) -> (i32, i32) {
    %c0_i32 = arith.constant 0 : i32
    %c0_i32_0 = arith.constant 0 : i32
    %c0_i32_1 = arith.constant 0 : i32
    return %c0_i32, %c0_i32_0 : i32, i32
  }
  func.func @transform_3(%arg0: i32, %arg1: i32) -> (i32, i32) {
    %c0_i32 = arith.constant 0 : i32
    %c0_i32_0 = arith.constant 0 : i32
    return %arg0, %c0_i32 : i32, i32
  }
  func.func @transform_4(%arg0: i32, %arg1: i32) -> (i32, i32) {
    %c0_i32 = arith.constant 0 : i32
    %c0_i32_0 = arith.constant 0 : i32
    %c0_i32_1 = arith.constant 0 : i32
    return %c0_i32, %c0_i32_0 : i32, i32
  }
  func.func @transform_5(%arg0: i32, %arg1: i32) -> (i32, i32) {
    %c0_i32 = arith.constant 0 : i32
    %c0_i32_0 = arith.constant 0 : i32
    return %arg0, %c0_i32 : i32, i32
  }
  func.func @transform_6(%arg0: i32, %arg1: i32) -> (i32, i32) {
    %c0_i32 = arith.constant 0 : i32
    %c0_i32_0 = arith.constant 0 : i32
    return %arg0, %c0_i32 : i32, i32
  }
  func.func @transform_7(%arg0: i32, %arg1: i32) -> (i32, i32, i32) {
    %c0_i32 = arith.constant 0 : i32
    %c0_i32_0 = arith.constant 0 : i32
    %c0_i32_1 = arith.constant 0 : i32
    return %arg0, %c0_i32, %c0_i32_0 : i32, i32, i32
  }
}

</mosaic_0001>

<llo_original>
// kernel: tpu_custom_call.1
$region0: #{tpu_custom_call.1}
  #allocation0 [shape = 'u32[]', space=smem, size = 0x4, offset = 0x4, fixed_abs, tag = 'smem constant byte address 0x4 - core index']
  #allocation1 [shape = 'u32[144,128]{1,0:T(1,128)}', space=vmem, size = 0x12000, scoped, tag = 'internal scratch']
  #allocation2 [shape = 'f32[8,128]{1,0:T(8,128)}', space=vmem, size = 0x1000, scoped, tag = 'scratch operand']
  %s0 = inlined_call_operand.hbm [shape: f32[8,256], index: 0, kind: input, shape index: {}]
  %s1 = inlined_call_operand.hbm [shape: f32[4,256], index: 1, kind: input, shape index: {}]
  %s2 = inlined_call_operand.vmem [shape: f32[1,256], index: 2, kind: input, shape index: {}]
  %s3 = inlined_call_operand.vmem [shape: f32[2,128], index: 3, kind: input, shape index: {}]
  %s4 = inlined_call_operand.vmem [shape: f32[1,128], index: 4, kind: input, shape index: {}]
  %s5 = inlined_call_operand.hbm [shape: f32[2,128], index: 5, kind: output, shape index: {0}]
  %s6 = inlined_call_operand.hbm [shape: f32[2,128], index: 6, kind: output, shape index: {1}]
  %s7 = inlined_call_operand.hbm [shape: f32[1,1,128], index: 7, kind: output, shape index: {2}]
  %8 = xla_tuple %s5, %s6, %s7
  %s9 = sld [smem:[#allocation0]]
  $region89: #{tpu_custom_call.1} parent=0
    _
  %s11 = ssub.s32 1, %s9
  %s12 = scalar_select 0, %s11, %s9
  $region1: #{tpu_custom_call.1} parent=0
    #allocation3 [shape = 'u8[8192]{0}', space=vmem, size = 0x2000, scoped, tag = 'input window, operand 0']
    #allocation4 [shape = 's32[2]{0}', space=sflag, size = 0x8, scoped, tag = 'scoped memory for tpu_custom_call.1']
    #allocation5 [shape = 's32[2]{0}', space=sflag, size = 0x8, scoped, tag = 'scoped memory for tpu_custom_call.1']
    #allocation6 [shape = 'u8[4096]{0}', space=vmem, size = 0x1000, scoped, tag = 'input window, operand 1, single buffered']
    #allocation7 [shape = 's32[1]{0}', space=sflag, size = 0x4, scoped, tag = 'scoped memory for tpu_custom_call.1']
    #allocation8 [shape = 'u8[1024]{0}', space=vmem, size = 0x400, scoped, tag = 'output window, operand 0, single buffered']
    #allocation9 [shape = 'u8[1024]{0}', space=vmem, size = 0x400, scoped, tag = 'output window, operand 1, single buffered']
    #allocation10 [shape = 's32[1]{0}', space=sflag, size = 0x4, scoped, tag = 'scoped memory for tpu_custom_call.1']
    #allocation11 [shape = 'u8[512]{0}', space=vmem, size = 0x400, scoped, tag = 'output window, operand 2, single buffered']
    %13 = vsyncpa [#allocation4], 0
    %s14 = scalar_lea.sflag [#allocation4], 1
    %15 = vsyncpa %s14, 0
    %16 = vsyncpa [#allocation7], 0
    %17 = vsyncpa [#allocation5], 0
    %18 = vsyncpa [#allocation10], 0
    loop: start=0, step=1, limit=4
    $region2: #{tpu_custom_call.1} parent=1 // loop_pre_header
      _
    $region3: #{tpu_custom_call.1} parent=1 // loop_header
      %s20 = sphi 0, %s24
      %p21 = scmp.ge.s32.totalorder %s20, 4
      %s27 = sphi 0, %s39
      %s28 = sphi 0, %s35
      %s29 = sphi 0, %s27
      %s30 = sphi 0, %s28
      %s31 = sphi 0, %s29
      %s32 = sphi 0, %s30
      %s44 = sphi 0, %s46
      %s47 = sphi 0, %s44
      %s48 = sphi 0, %s47
      %s64 = sphi 0, %s48
      %s68 = sphi 0, %s68
      %s70 = sphi 0, %s68
      %s71 = sphi 0, %s70
      %s85 = sphi 0, %s71
      %s89 = sphi 0, %s89
      %s91 = sphi 0, %s89
      %s92 = sphi 0, %s91
      %s106 = sphi 0, %s92
      %s112 = sphi 0, %s114
      %s115 = sphi 0, %s112
      %s116 = sphi 0, %s115
      %s132 = sphi 0, %s116
      %s136 = sphi 0, %s136
      %s138 = sphi 0, %s136
      %s139 = sphi 0, %s138
      %s153 = sphi 0, %s139
      %s159 = sphi 0, %s161
      %s162 = sphi 0, %s159
      %s163 = sphi 0, %s162
      %s179 = sphi 0, %s163
      %s185 = sphi 0, %s187
      %s188 = sphi 0, %s185
      %s189 = sphi 0, %s188
      %s205 = sphi 0, %s189
      %s211 = sphi 0, %s213
      %s214 = sphi 0, %s211
      %s215 = sphi 0, %s214
      %s231 = sphi 0, %s215
    $region4: #{tpu_custom_call.1} parent=1 // loop_header_branch
      %23 = sbr.rel (%p21) target = $region8
    $region5: #{tpu_custom_call.1} parent=1 // loop_body
      %s25 = ssub.s32 %s20, 1
      %s26 = ssub.s32 %s20, 2
      %s33 = sadd.s32 1, %s28
      %p34 = scmp.ge.s32.totalorder %s33, 2
      %s35 = scalar_select %p34, 0, %s33
      %s36 = sadd.s32 1, %s27
      %s37 = scalar_select %p34, %s36, %s27
      %p38 = scmp.ge.s32.totalorder %s37, 1
      %s39 = scalar_select %p38, 0, %s37
      %s40 = ssub.s32 %s27, %s39
      %s41 = ssub.s32 %s28, %s35
      %s42 = sor.u32 %s40, %s41
      %p43 = scmp.eq.s32.totalorder %s42, 0
      %s45 = sadd.s32 %s44, 1
      %s46 = scalar_select %p43, %s44, %s45
      %p49 = pneg %p43
      %p50 = scmp.eq.s32.totalorder %s20, 1
      %p51 = por %p49, %p50
      %p52 = scmp.ne.s32.totalorder %s44, %s47
      %p53 = scmp.eq.s32.totalorder %s20, 0
      %p54 = por %p52, %p53
      %p55 = scmp.ne.s32.totalorder %s44, %s47
      %p56 = scmp.eq.s32.totalorder %s25, 1
      %p57 = por %p55, %p56
      %p58 = scmp.ne.s32.totalorder %s47, %s48
      %p59 = scmp.eq.s32.totalorder %s25, 0
      %p60 = por %p58, %p59
      %p61 = scmp.ne.s32.totalorder %s47, %s48
      %p62 = scmp.eq.s32.totalorder %s26, 1
      %p63 = por %p61, %p62
      %p65 = scmp.ne.s32.totalorder %s48, %s64
      %p66 = scmp.eq.s32.totalorder %s26, 0
      %p67 = por %p65, %p66
      %s69 = sadd.s32 %s68, 1
      %p72 = scmp.eq.s32.totalorder %s20, 1
      %p73 = scmp.ne.s32.totalorder %s68, %s70
      %p74 = scmp.eq.s32.totalorder %s20, 0
      %p75 = por %p73, %p74
      %p76 = scmp.ne.s32.totalorder %s68, %s70
      %p77 = scmp.eq.s32.totalorder %s25, 1
      %p78 = por %p76, %p77
      %p79 = scmp.ne.s32.totalorder %s70, %s71
      %p80 = scmp.eq.s32.totalorder %s25, 0
      %p81 = por %p79, %p80
      %p82 = scmp.ne.s32.totalorder %s70, %s71
      %p83 = scmp.eq.s32.totalorder %s26, 1
      %p84 = por %p82, %p83
      %p86 = scmp.ne.s32.totalorder %s71, %s85
      %p87 = scmp.eq.s32.totalorder %s26, 0
      %p88 = por %p86, %p87
      %s90 = sadd.s32 %s89, 1
      %p93 = scmp.eq.s32.totalorder %s20, 1
      %p94 = scmp.ne.s32.totalorder %s89, %s91
      %p95 = scmp.eq.s32.totalorder %s20, 0
      %p96 = por %p94, %p95
      %p97 = scmp.ne.s32.totalorder %s89, %s91
      %p98 = scmp.eq.s32.totalorder %s25, 1
      %p99 = por %p97, %p98
      %p100 = scmp.ne.s32.totalorder %s91, %s92
      %p101 = scmp.eq.s32.totalorder %s25, 0
      %p102 = por %p100, %p101
      %p103 = scmp.ne.s32.totalorder %s91, %s92
      %p104 = scmp.eq.s32.totalorder %s26, 1
      %p105 = por %p103, %p104
      %p107 = scmp.ne.s32.totalorder %s92, %s106
      %p108 = scmp.eq.s32.totalorder %s26, 0
      %p109 = por %p107, %p108
      %s110 = ssub.s32 %s27, %s39
      %p111 = scmp.eq.s32.totalorder %s110, 0
      %s113 = sadd.s32 %s112, 1
      %s114 = scalar_select %p111, %s112, %s113
      %p117 = pneg %p111
      %p118 = scmp.eq.s32.totalorder %s20, 1
      %p119 = por %p117, %p118
      %p120 = scmp.ne.s32.totalorder %s112, %s115
      %p121 = scmp.eq.s32.totalorder %s20, 0
      %p122 = por %p120, %p121
      %p123 = scmp.ne.s32.totalorder %s112, %s115
      %p124 = scmp.eq.s32.totalorder %s25, 1
      %p125 = por %p123, %p124
      %p126 = scmp.ne.s32.totalorder %s115, %s116
      %p127 = scmp.eq.s32.totalorder %s25, 0
      %p128 = por %p126, %p127
      %p129 = scmp.ne.s32.totalorder %s115, %s116
      %p130 = scmp.eq.s32.totalorder %s26, 1
      %p131 = por %p129, %p130
      %p133 = scmp.ne.s32.totalorder %s116, %s132
      %p134 = scmp.eq.s32.totalorder %s26, 0
      %p135 = por %p133, %p134
      %s137 = sadd.s32 %s136, 1
      %p140 = scmp.eq.s32.totalorder %s20, 1
      %p141 = scmp.ne.s32.totalorder %s136, %s138
      %p142 = scmp.eq.s32.totalorder %s20, 0
      %p143 = por %p141, %p142
      %p144 = scmp.ne.s32.totalorder %s136, %s138
      %p145 = scmp.eq.s32.totalorder %s25, 1
      %p146 = por %p144, %p145
      %p147 = scmp.ne.s32.totalorder %s138, %s139
      %p148 = scmp.eq.s32.totalorder %s25, 0
      %p149 = por %p147, %p148
      %p150 = scmp.ne.s32.totalorder %s138, %s139
      %p151 = scmp.eq.s32.totalorder %s26, 1
      %p152 = por %p150, %p151
      %p154 = scmp.ne.s32.totalorder %s139, %s153
      %p155 = scmp.eq.s32.totalorder %s26, 0
      %p156 = por %p154, %p155
      %s157 = ssub.s32 %s27, %s39
      %p158 = scmp.eq.s32.totalorder %s157, 0
      %s160 = sadd.s32 %s159, 1
      %s161 = scalar_select %p158, %s159, %s160
      %p164 = pneg %p158
      %p165 = scmp.eq.s32.totalorder %s20, 1
      %p166 = por %p164, %p165
      %p167 = scmp.ne.s32.totalorder %s159, %s162
      %p168 = scmp.eq.s32.totalorder %s20, 0
      %p169 = por %p167, %p168
      %p170 = scmp.ne.s32.totalorder %s159, %s162
      %p171 = scmp.eq.s32.totalorder %s25, 1
      %p172 = por %p170, %p171
      %p173 = scmp.ne.s32.totalorder %s162, %s163
      %p174 = scmp.eq.s32.totalorder %s25, 0
      %p175 = por %p173, %p174
      %p176 = scmp.ne.s32.totalorder %s162, %s163
      %p177 = scmp.eq.s32.totalorder %s26, 1
      %p178 = por %p176, %p177
      %p180 = scmp.ne.s32.totalorder %s163, %s179
      %p181 = scmp.eq.s32.totalorder %s26, 0
      %p182 = por %p180, %p181
      %s183 = ssub.s32 %s27, %s39
      %p184 = scmp.eq.s32.totalorder %s183, 0
      %s186 = sadd.s32 %s185, 1
      %s187 = scalar_select %p184, %s185, %s186
      %p190 = pneg %p184
      %p191 = scmp.eq.s32.totalorder %s20, 1
      %p192 = por %p190, %p191
      %p193 = scmp.ne.s32.totalorder %s185, %s188
      %p194 = scmp.eq.s32.totalorder %s20, 0
      %p195 = por %p193, %p194
      %p196 = scmp.ne.s32.totalorder %s185, %s188
      %p197 = scmp.eq.s32.totalorder %s25, 1
      %p198 = por %p196, %p197
      %p199 = scmp.ne.s32.totalorder %s188, %s189
      %p200 = scmp.eq.s32.totalorder %s25, 0
      %p201 = por %p199, %p200
      %p202 = scmp.ne.s32.totalorder %s188, %s189
      %p203 = scmp.eq.s32.totalorder %s26, 1
      %p204 = por %p202, %p203
      %p206 = scmp.ne.s32.totalorder %s189, %s205
      %p207 = scmp.eq.s32.totalorder %s26, 0
      %p208 = por %p206, %p207
      %s209 = ssub.s32 %s27, %s39
      %p210 = scmp.eq.s32.totalorder %s209, 0
      %s212 = sadd.s32 %s211, 1
      %s213 = scalar_select %p210, %s211, %s212
      %p216 = pneg %p210
      %p217 = scmp.eq.s32.totalorder %s20, 1
      %p218 = por %p216, %p217
      %p219 = scmp.ne.s32.totalorder %s211, %s214
      %p220 = scmp.eq.s32.totalorder %s20, 0
      %p221 = por %p219, %p220
      %p222 = scmp.ne.s32.totalorder %s211, %s214
      %p223 = scmp.eq.s32.totalorder %s25, 1
      %p224 = por %p222, %p223
      %p225 = scmp.ne.s32.totalorder %s214, %s215
      %p226 = scmp.eq.s32.totalorder %s25, 0
      %p227 = por %p225, %p226
      %p228 = scmp.ne.s32.totalorder %s214, %s215
      %p229 = scmp.eq.s32.totalorder %s26, 1
      %p230 = por %p228, %p229
      %p232 = scmp.ne.s32.totalorder %s215, %s231
      %p233 = scmp.eq.s32.totalorder %s26, 0
      %p234 = por %p232, %p233
      %p235 = scmp.le.s32.totalorder 1, %s20
      %p236 = scmp.lt.s32.totalorder %s20, 3
      %p237 = pnand %p235, %p236
      %p238 = pneg %p237
      // Predicated region
      $region9: #{tpu_custom_call.1} parent=5 // pred_check
        _
      $region10: #{tpu_custom_call.1} parent=5 // pred_check_branch
        %240 = sbr.rel (%p237) target = $region12
      $region11: #{tpu_custom_call.1} parent=5 // pred_region
        %s241 = ssub.s32 %s20, 1
        // Predicated region
        $region13: #{tpu_custom_call.1} parent=11 // pred_check
          %p242 = pneg %p81
        $region14: #{tpu_custom_call.1} parent=11 // pred_check_branch
          %244 = sbr.rel (%p242) target = $region16
        $region15: #{tpu_custom_call.1} parent=11 // pred_region
          %s246 = ssub.s32 128, 128
          %247 = vsyncadd [#allocation7], %s246
          %s249 = sshll.u32 [#allocation6], 4
          %s250 = int_to_ptr.vmem [resolvable:$true] %s249
          %252 = dma.hbm_to_vmem [thread:$0]  %s1, 128, %s250, [#allocation7]
        $region16: #{tpu_custom_call.1} parent=11 // pred_fallthru
          _
        // Predicated region
        $region17: #{tpu_custom_call.1} parent=11 // pred_check
          %p253 = pneg %p102
        $region18: #{tpu_custom_call.1} parent=11 // pred_check_branch
          %255 = sbr.rel (%p253) target = $region20
        $region19: #{tpu_custom_call.1} parent=11 // pred_region
          _
        $region20: #{tpu_custom_call.1} parent=11 // pred_fallthru
          _
        // Predicated region
        $region21: #{tpu_custom_call.1} parent=11 // pred_check
          %p256 = pneg %p128
        $region22: #{tpu_custom_call.1} parent=11 // pred_check_branch
          %258 = sbr.rel (%p256) target = $region24
        $region23: #{tpu_custom_call.1} parent=11 // pred_region
          %p259 = scmp.lt.s32.totalorder %s29, 0
          %s260 = scalar_select %p259, %s29, 0
          %s261 = smul.addr %s260, 2
          %s262 = scalar_lea.vmem %s3, %s261
        $region24: #{tpu_custom_call.1} parent=11 // pred_fallthru
          _
        // Predicated region
        $region25: #{tpu_custom_call.1} parent=11 // pred_check
          %p263 = pneg %p149
        $region26: #{tpu_custom_call.1} parent=11 // pred_check_branch
          %265 = sbr.rel (%p263) target = $region28
        $region27: #{tpu_custom_call.1} parent=11 // pred_region
          _
        $region28: #{tpu_custom_call.1} parent=11 // pred_fallthru
          _
      $region12: #{tpu_custom_call.1} parent=5 // pred_fallthru
        _
      %p266 = scmp.lt.s32.totalorder %s20, 2
      // Predicated region
      $region29: #{tpu_custom_call.1} parent=5 // pred_check
        %p267 = pneg %p266
      $region30: #{tpu_custom_call.1} parent=5 // pred_check_branch
        %269 = sbr.rel (%p267) target = $region32
      $region31: #{tpu_custom_call.1} parent=5 // pred_region
        // Predicated region
        $region33: #{tpu_custom_call.1} parent=31 // pred_check
          %p270 = pneg %p54
        $region34: #{tpu_custom_call.1} parent=31 // pred_check_branch
          %272 = sbr.rel (%p270) target = $region36
        $region35: #{tpu_custom_call.1} parent=31 // pred_region
          %s273 = sand.u32 %s44, 1
          %s274 = scalar_lea.sflag [#allocation4], %s273
          %s275 = sand.u32 %s44, 1
          %s276 = smul.addr %s275, 8
          %s277 = scalar_lea.vmem [#allocation3], %s276
          %s279 = ssub.s32 128, 128
          %280 = vsyncadd %s274, %s279
          %s281 = smul.addr %s27, 2
          %s282 = sadd.s32 %s28, %s281
          %s283 = smul.addr %s282, 128
          %s284 = scalar_lea.hbm %s0, %s283
          %s286 = sshll.u32 %s277, 4
          %s287 = int_to_ptr.vmem [resolvable:$true] %s286
          %289 = dma.hbm_to_vmem [thread:$0]  %s284, 128, %s287, %s274
        $region36: #{tpu_custom_call.1} parent=31 // pred_fallthru
          _
      $region32: #{tpu_custom_call.1} parent=5 // pred_fallthru
        _
      %p290 = scmp.le.s32.totalorder 1, %s20
      %p291 = scmp.lt.s32.totalorder %s20, 3
      %p292 = pnand %p290, %p291
      %p293 = pneg %p292
      // Predicated region
      $region37: #{tpu_custom_call.1} parent=5 // pred_check
        _
      $region38: #{tpu_custom_call.1} parent=5 // pred_check_branch
        %295 = sbr.rel (%p292) target = $region40
      $region39: #{tpu_custom_call.1} parent=5 // pred_region
        %s296 = ssub.s32 %s20, 1
        %s297 = sand.u32 %s47, 1
        %s298 = scalar_lea.sflag [#allocation4], %s297
        %s299 = sand.u32 %s47, 1
        %s300 = smul.addr %s299, 8
        %s301 = scalar_lea.vmem [#allocation3], %s300
        // Predicated region
        $region41: #{tpu_custom_call.1} parent=39 // pred_check
          %p302 = pneg %p60
        $region42: #{tpu_custom_call.1} parent=39 // pred_check_branch
          %304 = sbr.rel (%p302) target = $region44
        $region43: #{tpu_custom_call.1} parent=39 // pred_region
          %305 = dma.done %s298, 128
        $region44: #{tpu_custom_call.1} parent=39 // pred_fallthru
          _
        // Predicated region
        $region45: #{tpu_custom_call.1} parent=39 // pred_check
          %p306 = pneg %p81
        $region46: #{tpu_custom_call.1} parent=39 // pred_check_branch
          %308 = sbr.rel (%p306) target = $region48
        $region47: #{tpu_custom_call.1} parent=39 // pred_region
          %309 = dma.done [#allocation7], 128
        $region48: #{tpu_custom_call.1} parent=39 // pred_fallthru
          _
        %s310 = sand.u32 %s47, 1
        %s311 = scalar_lea.sflag [#allocation4], %s310
        %s312 = sand.u32 %s47, 1
        %s313 = smul.addr %s312, 8
        %s314 = scalar_lea.vmem [#allocation3], %s313
        %p315 = pneg %p60
        %p316 = pneg %p57
        %p317 = pneg %p81
        %p318 = pneg %p78
        %p319 = pneg %p102
        %p320 = pneg %p99
        %p321 = scmp.lt.s32.totalorder %s29, 0
        %s322 = scalar_select %p321, %s29, 0
        %s323 = smul.addr %s322, 2
        %s324 = scalar_lea.vmem %s3, %s323
        %p325 = pneg %p128
        %p326 = pneg %p125
        %p327 = pneg %p149
        %p328 = pneg %p146
        %p329 = pneg %p175
        %p330 = pneg %p172
        %p331 = pneg %p201
        %p332 = pneg %p198
        %p333 = pneg %p227
        %p334 = pneg %p224
        %p335 = scmp.lt.s32.totalorder %s29, 0
        %s336 = scalar_select %p335, %s29, 0
        %s337 = smul.addr %s336, 2
        %s338 = scalar_lea.vmem %s3, %s337
        %p339 = scmp.eq.s32.totalorder %s30, 0
        // Predicated region
        $region49: #{tpu_custom_call.1} parent=39 // pred_check
          %p340 = pneg %p339
        $region50: #{tpu_custom_call.1} parent=39 // pred_check_branch
          %342 = sbr.rel (%p340) target = $region52
        $region51: #{tpu_custom_call.1} parent=39 // pred_region
          %v343 = vld [vmem:[%s301] sm:$0xff]
          %344 = vst [vmem:[#allocation2] sm:$0xff] %v343
        $region52: #{tpu_custom_call.1} parent=39 // pred_fallthru
          _
        %p345 = scmp.ne.s32.totalorder %s30, 0
        // Predicated region
        $region53: #{tpu_custom_call.1} parent=39 // pred_check
          %p346 = pneg %p345
        $region54: #{tpu_custom_call.1} parent=39 // pred_check_branch
          %348 = sbr.rel (%p346) target = $region56
        $region55: #{tpu_custom_call.1} parent=39 // pred_region
          %v349 = vld [vmem:[#allocation2] sm:$0xff]
          %v350 = vld [vmem:[%s301] sm:$0xff]
          %v351 = vadd.f32 %v349, %v350
          %352 = vst [vmem:[#allocation2] sm:$0xff] %v351
        $region56: #{tpu_custom_call.1} parent=39 // pred_fallthru
          _
        %p353 = scmp.eq.s32.totalorder %s30, 1
        // Predicated region
        $region57: #{tpu_custom_call.1} parent=39 // pred_check
          %p354 = pneg %p353
        $region58: #{tpu_custom_call.1} parent=39 // pred_check_branch
          %356 = sbr.rel (%p354) target = $region60
        $region59: #{tpu_custom_call.1} parent=39 // pred_region
          %v357 = vld [vmem:[#allocation2] sm:$0xff]
          %v359 = vcombine.high %v357, %v357
          %vm361 = vcmask 1043456
          %v362 = vsel %vm361, %v357, 0.0
          %363 = vadd.xlane.f32.xlu0 %v362
          %v364 = vpop.xlane.xlu0 %363
          %v365 = vsel %vm361, %v359, 0.0
          %366 = vadd.xlane.f32.xlu0 %v365
          %v367 = vpop.xlane.xlu0 %366
          %v368 = vmul.f32 %v364, 0.00390625
          %v369 = vmul.f32 %v367, 0.00390625
          %v370 = vld [vmem:[#allocation6] sm:$0xff]
          %v371 = vld [vmem:[%s2] sm:$0x3]
          %v373 = vlaneseq
          %v374 = vshrl.u32 %v373, 7
          %v375 = vsub.s32 0, %v374
          %v376 = vrot.slane %v371, %v375
          %v377 = vlaneseq
          %v378 = vshrl.u32 %v377, 7
          %v379 = vsub.s32 1, %v378
          %v380 = vrot.slane %v371, %v379
          %v385 = vlaneseq
          %v386 = vand.u32 %v385, 127
          %v387 = vlaneseq
          %v388 = vshrl.u32 %v387, 7
          %v389 = vsub.s32 %v386, %v388
          %v390 = vrot.slane %v368, %v389
          %v391 = vlaneseq
          %v392 = vshrl.u32 %v391, 7
          %v393 = vsub.s32 %v386, %v392
          %v394 = vrot.slane %v369, %v393
          %vm395 = vcmask 1041409
          %v396 = vsel %vm395, %v394, %v390
          %v398 = vcombine.high %v370, %v370
          %vm399 = vcmask 31744
          %v400 = vsel %vm399, %v396, 0
          %v402 = vsel %vm361, %v370, 0
          %v404 = vsel %vm361, %v398, 0
          %406 = vmatprep.subr.mxu0 %v404
          %407 = vmatpush1.msra.mxu0 %v402
          %408 = vmatprep.subr.mxu0 0.0
          %409 = vmatpush1.msra.mxu0 0.0
          %410 = vmatprep.subr.mxu0 0.0
          %411 = vmatpush1.msra.mxu0 0.0
          %412 = vmatprep.subr.mxu0 0.0
          %413 = vmatpush1.msra.mxu0 0.0
          %414 = vmatprep.subr.mxu0 0.0
          %415 = vmatpush1.msra.mxu0 0.0
          %416 = vmatprep.subr.mxu0 0.0
          %417 = vmatpush1.msra.mxu0 0.0
          %418 = vmatprep.subr.mxu0 0.0
          %419 = vmatpush1.msra.mxu0 0.0
          %420 = vmatprep.subr.mxu0 0.0
          %421 = vmatpush1.msra.mxu0 0.0
          %422 = vmatprep.subr.mxu0 0.0
          %423 = vmatpush1.msra.mxu0 0.0
          %424 = vmatprep.subr.mxu0 0.0
          %425 = vmatpush1.msra.mxu0 0.0
          %426 = vmatprep.subr.mxu0 0.0
          %427 = vmatpush1.msra.mxu0 0.0
          %428 = vmatprep.subr.mxu0 0.0
          %429 = vmatpush1.msra.mxu0 0.0
          %430 = vmatprep.subr.mxu0 0.0
          %431 = vmatpush1.msra.mxu0 0.0
          %432 = vmatprep.subr.mxu0 0.0
          %433 = vmatpush1.msra.mxu0 0.0
          %434 = vmatprep.subr.mxu0 0.0
          %435 = vmatpush1.msra.mxu0 0.0
          %436 = vmatprep.subr.mxu0 0.0
          %437 = vmatpush1.msra.mxu0 0.0
          %438 = vmatprep.subr.mxu0 0.0
          %439 = vmatpush1.msra.mxu0 0.0
          %440 = vmatprep.subr.mxu0 0.0
          %441 = vmatpush1.msra.mxu0 0.0
          %442 = vmatprep.subr.mxu0 0.0
          %443 = vmatpush1.msra.mxu0 0.0
          %444 = vmatprep.subr.mxu0 0.0
          %445 = vmatpush1.msra.mxu0 0.0
          %446 = vmatprep.subr.mxu0 0.0
          %447 = vmatpush1.msra.mxu0 0.0
          %448 = vmatprep.subr.mxu0 0.0
          %449 = vmatpush1.msra.mxu0 0.0
          %450 = vmatprep.subr.mxu0 0.0
          %451 = vmatpush1.msra.mxu0 0.0
          %452 = vmatprep.subr.mxu0 0.0
          %453 = vmatpush1.msra.mxu0 0.0
          %454 = vmatprep.subr.mxu0 0.0
          %455 = vmatpush1.msra.mxu0 0.0
          %456 = vmatprep.subr.mxu0 0.0
          %457 = vmatpush1.msra.mxu0 0.0
          %458 = vmatprep.subr.mxu0 0.0
          %459 = vmatpush1.msra.mxu0 0.0
          %460 = vmatprep.subr.mxu0 0.0
          %461 = vmatpush1.msra.mxu0 0.0
          %462 = vmatprep.subr.mxu0 0.0
          %463 = vmatpush1.msra.mxu0 0.0
          %464 = vmatprep.subr.mxu0 0.0
          %465 = vmatpush1.msra.mxu0 0.0
          %466 = vmatprep.subr.mxu0 0.0
          %467 = vmatpush1.msra.mxu0 0.0
          %468 = vmatprep.subr.mxu0 0.0
          %469 = vmatpush1.msra.mxu0 0.0
          %470 = vmatprep.mubr.f32.mxu0 0.0
          %471 = vmatmul.mubr.f32.gmra.mrb[0].mxu0 %v400
          %v472 = vpop.f32.mrb[0].mxu0
          %v473 = vadd.f32 %v376, %v472
          %v474 = vpop.f32.mrb[0].mxu0
          %v475 = vadd.f32 %v380, %v474
          %476 = vdwg.mxu0
          %477 = vst [vmem:[#allocation8] sm:$0x3] %v473
          %478 = vst [vmem:[#allocation9] sm:$0x3] %v475
          %v479 = vld [vmem:[%s338] sm:$0x3]
          %v480 = vld [vmem:[%s4] sm:$0x1]
          %v481 = vmax.f32 %v475, 0.0
          %v482 = vand.u32 2147483647, %v475
          %v483 = vsub.f32 0.0, %v482
          %v484 = vmul.f32 %v483, 1.442695
          %v485 = vpow.pop %v484
          %v486 = vadd.f32 %v485, 1.0
          %v487 = vlog2.pop %v486
          %v488 = vmul.f32 %v487, 0.6931472
          %v489 = vmul.f32 -0.5, %v485
          %v490 = vadd.f32 %v489, 1.0
          %v491 = vmul.f32 %v490, %v485
          %v492 = vand.u32 2147483647, %v485
          %vm493 = vcmp.lt.f32.partialorder %v492, 0.0004427343
          %v494 = vsel %vm493, %v491, %v488
          %v495 = vadd.f32 %v481, %v494
          %v497 = vlaneseq
          %v498 = vshrl.u32 %v497, 7
          %v499 = vsub.s32 0, %v498
          %v500 = vrot.slane %v480, %v499
          %v502 = vmul.f32 %v500, %v479
          %v503 = vadd.f32 %v502, 1.0
          %v504 = vsub.f32 %v503, %v479
          %v505 = vmul.f32 %v495, %v504
          %v506 = vmul.f32 %v502, %v475
          %v507 = vsub.f32 %v505, %v506
          %vm508 = vcmp.lt.s32.totalorder %v386, 14
          %v509 = vsel %vm508, 1, 0
          %v510 = vcvt.s32.f32 %v509
          %v511 = vmul.f32 %v507, %v510
          %vm512 = vcmask 1041408
          %v513 = vsel %vm512, %v511, 0.0
          %514 = vadd.xlane.f32.xlu0 %v513
          %v515 = vpop.xlane.xlu0 %514
          %v516 = vrot.slane %v515, 4
          %v517 = vadd.f32 %v515, %v516
          %v518 = vrot.slane %v517, 2
          %v519 = vadd.f32 %v517, %v518
          %v520 = vrot.slane %v519, 1
          %v521 = vadd.f32 %v519, %v520
          %s522 = vtos %v521
          %v523 = vstv %s522
          %524 = vst [vmem:[#allocation11] sm:$0x1] %v523
        $region60: #{tpu_custom_call.1} parent=39 // pred_fallthru
          _
        // Predicated region
        $region61: #{tpu_custom_call.1} parent=39 // pred_check
          %p525 = pneg %p172
        $region62: #{tpu_custom_call.1} parent=39 // pred_check_branch
          %527 = sbr.rel (%p525) target = $region64
        $region63: #{tpu_custom_call.1} parent=39 // pred_region
          %s529 = ssub.s32 32, 32
          %530 = vsyncadd [#allocation5], %s529
          %s531 = smul.addr %s29, 32
          %s532 = scalar_lea.hbm %s5, %s531
          %s534 = sshll.u32 [#allocation8], 4
          %s535 = int_to_ptr.vmem [resolvable:$true] %s534
          %537 = dma.vmem_to_hbm [thread:$0]  %s535, 32, %s532, [#allocation5]
        $region64: #{tpu_custom_call.1} parent=39 // pred_fallthru
          _
        // Predicated region
        $region65: #{tpu_custom_call.1} parent=39 // pred_check
          %p538 = pneg %p198
        $region66: #{tpu_custom_call.1} parent=39 // pred_check_branch
          %540 = sbr.rel (%p538) target = $region68
        $region67: #{tpu_custom_call.1} parent=39 // pred_region
          %s542 = ssub.s32 32, 32
          %543 = vsyncadd [#allocation10], %s542
          %s544 = smul.addr %s29, 32
          %s545 = scalar_lea.hbm %s6, %s544
          %s547 = sshll.u32 [#allocation9], 4
          %s548 = int_to_ptr.vmem [resolvable:$true] %s547
          %550 = dma.vmem_to_hbm [thread:$0]  %s548, 32, %s545, [#allocation10]
        $region68: #{tpu_custom_call.1} parent=39 // pred_fallthru
          _
        // Predicated region
        $region69: #{tpu_custom_call.1} parent=39 // pred_check
          %p551 = pneg %p224
        $region70: #{tpu_custom_call.1} parent=39 // pred_check_branch
          %553 = sbr.rel (%p551) target = $region72
        $region71: #{tpu_custom_call.1} parent=39 // pred_region
          %s555 = ssub.s32 16, 16
          %556 = vsyncadd [#allocation10], %s555
          %s557 = smul.addr %s29, 16
          %s558 = scalar_lea.hbm %s7, %s557
          %s560 = sshll.u32 [#allocation11], 4
          %s561 = int_to_ptr.vmem [resolvable:$true] %s560
          %563 = dma.vmem_to_hbm [thread:$0]  %s561, 16, %s558, [#allocation10]
        $region72: #{tpu_custom_call.1} parent=39 // pred_fallthru
          _
        // Predicated region
        $region73: #{tpu_custom_call.1} parent=39 // pred_check
          %p564 = pneg %p172
        $region74: #{tpu_custom_call.1} parent=39 // pred_check_branch
          %566 = sbr.rel (%p564) target = $region76
        $region75: #{tpu_custom_call.1} parent=39 // pred_region
          %567 = dma.done [#allocation5], 32
        $region76: #{tpu_custom_call.1} parent=39 // pred_fallthru
          _
        // Predicated region
        $region77: #{tpu_custom_call.1} parent=39 // pred_check
          %p568 = pneg %p198
        $region78: #{tpu_custom_call.1} parent=39 // pred_check_branch
          %570 = sbr.rel (%p568) target = $region80
        $region79: #{tpu_custom_call.1} parent=39 // pred_region
          %571 = dma.done [#allocation10], 32
        $region80: #{tpu_custom_call.1} parent=39 // pred_fallthru
          _
        // Predicated region
        $region81: #{tpu_custom_call.1} parent=39 // pred_check
          %p572 = pneg %p224
        $region82: #{tpu_custom_call.1} parent=39 // pred_check_branch
          %574 = sbr.rel (%p572) target = $region84
        $region83: #{tpu_custom_call.1} parent=39 // pred_region
          %575 = dma.done [#allocation10], 16
        $region84: #{tpu_custom_call.1} parent=39 // pred_fallthru
          _
      $region40: #{tpu_custom_call.1} parent=5 // pred_fallthru
        _
      %p576 = scmp.le.s32.totalorder 2, %s20
      // Predicated region
      $region85: #{tpu_custom_call.1} parent=5 // pred_check
        %p577 = pneg %p576
      $region86: #{tpu_custom_call.1} parent=5 // pred_check_branch
        %579 = sbr.rel (%p577) target = $region88
      $region87: #{tpu_custom_call.1} parent=5 // pred_region
        %s580 = ssub.s32 %s20, 2
      $region88: #{tpu_custom_call.1} parent=5 // pred_fallthru
        _
    $region6: #{tpu_custom_call.1} parent=1 // loop_footer
      %s24 = sadd.s32 1, %s20
    $region7: #{tpu_custom_call.1} parent=1 // loop_footer_branch
      %19 = sbr.rel target = $region3
    $region8: #{tpu_custom_call.1} parent=1 // loop_exit
      _
    %581 = vsyncpa [#allocation4], 1
    %s582 = scalar_lea.sflag [#allocation4], 1
    %583 = vsyncpa %s582, 1
    %584 = vsyncpa [#allocation7], 1
    %585 = vsyncpa [#allocation5], 1
    %s586 = scalar_lea.sflag [#allocation5], 1
    %587 = vsyncpa %s586, 1
    %588 = vsyncpa [#allocation10], 1

</llo_original>
